<compile_context>
chip_gen: v7x
topology: tpu7x:2x2x1
jax: 0.10.0
libtpu: 0.0.40
codegen_flags: <defaults>
</compile_context>

<pallas_src>
import functools

import jax
import jax.numpy as jnp
from jax import lax
from jax.experimental import pallas as pl
from jax.experimental.pallas import tpu as pltpu


def _encoder_kernel(tok_ref, tbl_ref, b_ref, o_ref, *, batch, seq_pad, seq_len):
    # tok_ref : (B*Lp, 1) int32   flattened (sequence-padded) token ids
    # tbl_ref : (V+1, Hp) bf16    fused table = embedding_table @ W.T  (row 0 = zeros)
    # b_ref   : (1, Hp)   f32     Linear bias (zero-padded to Hp lanes)
    # o_ref   : (B, Hp)   f32     pooled output (max over L per batch element, + bias)
    m = tok_ref.shape[0]
    vocab_p1, hidden = tbl_ref.shape

    tok = tok_ref[...]                                               # (M, 1) int32
    lane_ids = lax.broadcasted_iota(jnp.int32, (m, vocab_p1), 1)     # (M, V+1)
    onehot = (tok == lane_ids).astype(tbl_ref.dtype)                 # (M, V+1), exact 0/1
    # NOTE: out-of-range / negative ids give an all-zero one-hot row (== padding embedding),
    # unlike torch.nn.Embedding which would raise.

    # Fused embedding-gather + Linear: one MXU matmul against the pre-folded table.
    y = jnp.dot(onehot, tbl_ref[...],
                preferred_element_type=jnp.float32)                  # (M, Hp) f32

    # Max-pool over the sequence axis (pure sublane reduction since seq_pad % 8 == 0).
    y3 = y.reshape(batch, seq_pad, hidden)                           # (B, Lp, Hp)
    if seq_pad != seq_len:                                           # static: mask padded rows
        pos = lax.broadcasted_iota(jnp.int32, y3.shape, 1)
        y3 = jnp.where(pos < seq_len, y3, -jnp.inf)
    pooled = jnp.max(y3, axis=1)                                     # (B, Hp) f32

    # Bias hoisted past the max; single lane-dense (B, Hp) store.
    o_ref[...] = (pooled + b_ref[...]).astype(o_ref.dtype)


@jax.jit
def sentence_encoder_forward(token_ids, emb_table, w, b):
    """token_ids: (B, L) int32; emb_table: (V+1, H) f32; w: (H_out, H_in) torch layout; b: (H,)."""
    B, L = token_ids.shape
    Vp, H = emb_table.shape
    assert Vp <= 128, "one-hot embedding gather requires vocab_size + 1 <= 128 lanes"

    # Fold embedding table and Linear weight once, in f32, then cast the single MXU operand.
    fused = emb_table @ w.T                                 # (V+1, H) f32; row 0 stays zero

    # Lane-dense H (multiple of 128) and sublane-aligned L (multiple of 8).
    Hp = ((H + 127) // 128) * 128
    Lp = ((L + 7) // 8) * 8
    fused_p = jnp.pad(fused, ((0, 0), (0, Hp - H))).astype(jnp.bfloat16)   # (V+1, Hp) bf16
    b_p = jnp.pad(b.astype(jnp.float32), (0, Hp - H)).reshape(1, Hp)       # (1, Hp)   f32
    tok_p = jnp.pad(token_ids.astype(jnp.int32), ((0, 0), (0, Lp - L)))    # (B, Lp)   int32

    M = B * Lp
    tok_flat = tok_p.reshape(M, 1)

    kernel = functools.partial(_encoder_kernel, batch=B, seq_pad=Lp, seq_len=L)

    bytes_accessed = M * 4 + Vp * Hp * 2 + Hp * 4 + B * Hp * 4
    out = pl.pallas_call(
        kernel,
        out_shape=jax.ShapeDtypeStruct((B, Hp), jnp.float32),
        # No grid: single invocation, whole arrays resident in VMEM.
        in_specs=[
            pl.BlockSpec(memory_space=pltpu.MemorySpace.VMEM),   # token ids
            pl.BlockSpec(memory_space=pltpu.MemorySpace.VMEM),   # fused table
            pl.BlockSpec(memory_space=pltpu.MemorySpace.VMEM),   # bias
        ],
        out_specs=pl.BlockSpec(memory_space=pltpu.MemorySpace.VMEM),
        cost_estimate=pl.CostEstimate(
            flops=2 * M * Vp * Hp,
            transcendentals=0,
            bytes_accessed=bytes_accessed,
        ),
    )(tok_flat, fused_p, b_p)

    # PyTorch .squeeze() on (B, H, 1): drops the trailing singleton (B > 1 here).
    # TODO(synk): for B == 1 PyTorch would also squeeze the batch dim to (H,).
    return out[:, :H]


def _reference_forward_bf16(token_ids, emb_table, w, b):
    """Pure-JAX reference mirroring the kernel's math (bf16 fused table, exact one-hot gather)."""
    fused = (emb_table @ w.T).astype(jnp.bfloat16).astype(jnp.float32)   # (V+1, H)
    y = jnp.take(fused, token_ids, axis=0)                               # (B, L, H) f32
    return jnp.max(y, axis=1) + b                                        # (B, H)


def _reference_forward_f32(token_ids, emb_table, w, b):
    """Full-f32 reference matching the PyTorch module."""
    e = jnp.take(emb_table, token_ids, axis=0)                           # (B, L, H)
    y = jnp.einsum("blh,oh->blo", e, w) + b                              # (B, L, H)
    return jnp.max(y, axis=1)                                            # (B, H)


if __name__ == "__main__":
    # Config implied by the module: hidden_size, vocab_size, max_length.
    hidden_size = 32
    vocab_size = 30          # embedding table has vocab_size + 1 rows
    max_length = 8
    batch = 2

    key = jax.random.PRNGKey(0)
    k_emb, k_w, k_b, k_tok = jax.random.split(key, 4)

    # Deterministic synthetic parameters.
    emb_table = jax.random.normal(k_emb, (vocab_size + 1, hidden_size), jnp.float32) * 0.1
    emb_table = emb_table.at[0].set(0.0)  # padding_idx=0 -> zero row
    w = jax.random.normal(k_w, (hidden_size, hidden_size), jnp.float32) * 0.1  # torch (out, in)
    b = jax.random.normal(k_b, (hidden_size,), jnp.float32) * 0.1

    # Deterministic token ids (0 acts as the padding id).
    token_ids = jax.random.randint(k_tok, (batch, max_length), 0, vocab_size + 1, jnp.int32)

    out = jax.block_until_ready(sentence_encoder_forward(token_ids, emb_table, w, b))

    ref_mirror = _reference_forward_bf16(token_ids, emb_table, w, b)
    ref_f32 = _reference_forward_f32(token_ids, emb_table, w, b)

    assert out.shape == (batch, hidden_size), out.shape
    assert jnp.allclose(out, ref_mirror, atol=1e-5, rtol=1e-5), "mismatch vs bf16-mirror reference"
    assert jnp.allclose(out, ref_f32, atol=2e-2, rtol=2e-2), "mismatch vs f32 reference"

    print("KERNEL_OK")
</pallas_src>

<mosaic_0001>
module attributes {stable_mosaic.version = 11 : i64} {
  func.func @_encoder_kernel(%arg0: memref<16x1xi32, #tpu.memory_space<vmem>>, %arg1: memref<31x128xbf16, #tpu.memory_space<vmem>>, %arg2: memref<1x128xf32, #tpu.memory_space<vmem>>, %arg3: memref<2x128xf32, #tpu.memory_space<vmem>>) attributes {dimension_semantics = [], scalar_prefetch = 0 : i64, scratch_operands = 0 : i64, tpu.core_type = #tpu.core_type<tc>} {
    %c0 = arith.constant 0 : index
    %c0_0 = arith.constant 0 : index
    %0 = vector.load %arg0[%c0, %c0_0] : memref<16x1xi32, #tpu.memory_space<vmem>>, vector<16x1xi32>
    %1 = tpu.iota {dimensions = array<i32: 1>} : vector<16x31xi32>
    %2 = vector.broadcast %0 : vector<16x1xi32> to vector<16x31xi32>
    %3 = arith.cmpi eq, %2, %1 : vector<16x31xi32>
    %4 = arith.extui %3 : vector<16x31xi1> to vector<16x31xi32>
    %5 = arith.sitofp %4 : vector<16x31xi32> to vector<16x31xf32>
    %6 = arith.truncf %5 : vector<16x31xf32> to vector<16x31xbf16>
    %c0_1 = arith.constant 0 : index
    %c0_2 = arith.constant 0 : index
    %7 = vector.load %arg1[%c0_1, %c0_2] : memref<31x128xbf16, #tpu.memory_space<vmem>>, vector<31x128xbf16>
    %cst = arith.constant dense<0.000000e+00> : vector<16x128xf32>
    %8 = tpu.matmul %6, %7, %cst {dimension_numbers = #tpu.dot_dimension_numbers<[1], [0], [0], [1], [0, 0, 1, 1], [], []>} : vector<16x31xbf16>, vector<31x128xbf16>, vector<16x128xf32> -> vector<16x128xf32>
    %9 = vector.shape_cast %8 : vector<16x128xf32> to vector<2x8x128xf32>
    %cst_3 = arith.constant dense<0xFF800000> : vector<2x128xf32>
    %10 = vector.multi_reduction <maximumf>, %9, %cst_3 [1] : vector<2x8x128xf32> to vector<2x128xf32>
    %c0_4 = arith.constant 0 : index
    %c0_5 = arith.constant 0 : index
    %11 = vector.load %arg2[%c0_4, %c0_5] : memref<1x128xf32, #tpu.memory_space<vmem>>, vector<1x128xf32>
    %12 = vector.broadcast %11 : vector<1x128xf32> to vector<2x128xf32>
    %13 = arith.addf %10, %12 : vector<2x128xf32>
    %c0_6 = arith.constant 0 : index
    %c0_7 = arith.constant 0 : index
    %14 = vector.load %arg3[%c0_6, %c0_7] : memref<2x128xf32, #tpu.memory_space<vmem>>, vector<2x128xf32>
    tpu.vector_store %arg3[%c0_6, %c0_7], %13 {strides = array<i32>} : memref<2x128xf32, #tpu.memory_space<vmem>>, vector<2x128xf32>,
    return
  }
}

</mosaic_0001>

<llo_original>
// kernel: sentence_encoder_forward.1
$region0: #{sentence_encoder_forward.1}
  #allocation0 [shape = 'u32[]', space=smem, size = 0x4, offset = 0x4, fixed_abs, tag = 'smem constant byte address 0x4 - core index']
  #allocation1 [shape = 'u32[144,128]{1,0:T(1,128)}', space=vmem, size = 0x12000, scoped, tag = 'internal scratch']
  %s0 = inlined_call_operand.vmem [shape: s32[16,1], index: 0, kind: input, shape index: {}]
  %s1 = inlined_call_operand.vmem [shape: bf16[31,128], index: 1, kind: input, shape index: {}]
  %s2 = inlined_call_operand.vmem [shape: f32[1,128], index: 2, kind: input, shape index: {}]
  %s3 = inlined_call_operand.hbm [shape: f32[2,128], index: 3, kind: output, shape index: {}]
  %s4 = sld [smem:[#allocation0]]
  $region22: #{sentence_encoder_forward.1} parent=0
    _
  %s6 = ssub.s32 1, %s4
  %s7 = scalar_select 0, %s6, %s4
  $region1: #{sentence_encoder_forward.1} parent=0
    #allocation2 [shape = 'u8[1024]{0}', space=vmem, size = 0x400, scoped, tag = 'output window, operand 0, single buffered']
    #allocation3 [shape = 's32[1]{0}', space=sflag, size = 0x4, scoped, tag = 'scoped memory for sentence_encoder_forward.1']
    %8 = vsyncpa [#allocation3], 0
    // Predicated region
    $region2: #{sentence_encoder_forward.1} parent=1 // pred_check
      _
    $region3: #{sentence_encoder_forward.1} parent=1 // pred_check_branch
      %10 = sbr.rel (0) target = $region5
    $region4: #{sentence_encoder_forward.1} parent=1 // pred_region
      _
    $region5: #{sentence_encoder_forward.1} parent=1 // pred_fallthru
      _
    // Predicated region
    $region6: #{sentence_encoder_forward.1} parent=1 // pred_check
      _
    $region7: #{sentence_encoder_forward.1} parent=1 // pred_check_branch
      %12 = sbr.rel (0) target = $region9
    $region8: #{sentence_encoder_forward.1} parent=1 // pred_region
      _
    $region9: #{sentence_encoder_forward.1} parent=1 // pred_fallthru
      _
    // Predicated region
    $region10: #{sentence_encoder_forward.1} parent=1 // pred_check
      _
    $region11: #{sentence_encoder_forward.1} parent=1 // pred_check_branch
      %14 = sbr.rel (0) target = $region13
    $region12: #{sentence_encoder_forward.1} parent=1 // pred_region
      _
    $region13: #{sentence_encoder_forward.1} parent=1 // pred_fallthru
      _
    %v16 = vld [vmem:[%s0] sm:$0xff]
    %v17 = vld [vmem:[%s0 + $0x8] sm:$0xff]
    %v18 = vlaneseq
    %v19 = vand.u32 %v18, 127
    %20 = vset.pattern.permute.xlu0 0
    %21 = vperm.xlu0 %20, %v16
    %v22 = vpop.permute.xlu0 %21
    %23 = vset.pattern.permute.xlu0 0
    %24 = vperm.xlu0 %23, %v17
    %v25 = vpop.permute.xlu0 %24
    %vm26 = vcmp.eq.s32.totalorder %v22, %v19
    %vm27 = vcmp.eq.s32.totalorder %v25, %v19
    %v28 = vsel %vm26, 1, 0
    %v29 = vsel %vm27, 1, 0
    %v30 = vcvt.s32.f32 %v28
    %v31 = vcvt.s32.f32 %v29
    %v32 = vpack.c.bf16 %v31, %v30
    %v33 = vld [vmem:[%s1] sm:$0xf]
    %v34 = vld [vmem:[%s1 + $0x4] sm:$0xf]
    %v35 = vld [vmem:[%s1 + $0x8] sm:$0xf]
    %v36 = vld [vmem:[%s1 + $0xc] sm:$0xf]
    %v41 = vunpack.c.l.b16 %v33
    %v42 = vunpack.c.l.b16 %v34
    %v43 = vunpack.c.l.b16 %v35
    %v44 = vunpack.c.l.b16 %v36
    %v45 = vpack.c.b16 %v42, %v41
    %v46 = vpack.c.b16 %v44, %v43
    %vm48 = vcmask 252928
    %v50 = vsel %vm48, %v32, 0
    %vm52 = vcmask 1046528
    %vm53 = vcmask 1047552
    %v54 = vsel %vm52, 4294967295, 65535
    %v55 = vsel %vm53, %v54, 0
    %v57 = vand.u32 %v46, %v55
    %59 = vmatprep.subr.bf16.mxu0 0
    %60 = vmatpush1.bf16.msra.mxu0 %v45
    %61 = vmatprep.subr.bf16.mxu0 0
    %62 = vmatpush1.bf16.msra.mxu0 %v57
    %63 = vmatprep.subr.bf16.mxu0 0
    %64 = vmatpush1.bf16.msra.mxu0 0
    %65 = vmatprep.subr.bf16.mxu0 0
    %66 = vmatpush1.bf16.msra.mxu0 0
    %67 = vmatprep.subr.bf16.mxu0 0
    %68 = vmatpush1.bf16.msra.mxu0 0
    %69 = vmatprep.subr.bf16.mxu0 0
    %70 = vmatpush1.bf16.msra.mxu0 0
    %71 = vmatprep.subr.bf16.mxu0 0
    %72 = vmatpush1.bf16.msra.mxu0 0
    %73 = vmatprep.subr.bf16.mxu0 0
    %74 = vmatpush1.bf16.msra.mxu0 0
    %75 = vmatprep.subr.bf16.mxu0 0
    %76 = vmatpush1.bf16.msra.mxu0 0
    %77 = vmatprep.subr.bf16.mxu0 0
    %78 = vmatpush1.bf16.msra.mxu0 0
    %79 = vmatprep.subr.bf16.mxu0 0
    %80 = vmatpush1.bf16.msra.mxu0 0
    %81 = vmatprep.subr.bf16.mxu0 0
    %82 = vmatpush1.bf16.msra.mxu0 0
    %83 = vmatprep.subr.bf16.mxu0 0
    %84 = vmatpush1.bf16.msra.mxu0 0
    %85 = vmatprep.subr.bf16.mxu0 0
    %86 = vmatpush1.bf16.msra.mxu0 0
    %87 = vmatprep.subr.bf16.mxu0 0
    %88 = vmatpush1.bf16.msra.mxu0 0
    %89 = vmatprep.subr.bf16.mxu0 0
    %90 = vmatpush1.bf16.msra.mxu0 0
    %91 = vmatprep.mubr.bf16.mxu0 0
    %92 = vmatmul.mubr.bf16.gmra.mrb[0].mxu0 %v50
    %v93 = vpop.f32.mrb[0].mxu0
    %v94 = vadd.f32 0.0, %v93
    %v95 = vpop.f32.mrb[0].mxu0
    %v96 = vpop.f32.mrb[0].mxu0
    %v97 = vadd.f32 0.0, %v96
    %v98 = vpop.f32.mrb[0].mxu0
    %99 = vdwg.mxu0
    %v100 = vrot.slane %v94, 4
    %v101 = vmax.f32 %v94, %v100
    %v102 = vrot.slane %v101, 2
    %v103 = vmax.f32 %v101, %v102
    %v104 = vrot.slane %v103, 1
    %v105 = vmax.f32 %v103, %v104
    %v106 = vrot.slane %v97, 4
    %v107 = vmax.f32 %v97, %v106
    %v108 = vrot.slane %v107, 2
    %v109 = vmax.f32 %v107, %v108
    %v110 = vrot.slane %v109, 1
    %v111 = vmax.f32 %v109, %v110
    %v112 = vld [vmem:[%s2] sm:$0x1]
    %v114 = vlaneseq
    %v115 = vshrl.u32 %v114, 7
    %v116 = vsub.s32 0, %v115
    %v117 = vrot.slane %v112, %v116
    %v119 = vadd.f32 %v105, %v117
    %v120 = vadd.f32 %v111, %v117
    %v123 = vrot.slane %v120, 7
    %vm124 = vcmask 1041409
    %v125 = vsel %vm124, %v123, %v119
    %127 = vst [vmem:[#allocation2] sm:$0x3] %v125
    // Predicated region
    $region14: #{sentence_encoder_forward.1} parent=1 // pred_check
      _
    $region15: #{sentence_encoder_forward.1} parent=1 // pred_check_branch
      %129 = sbr.rel (0) target = $region17
    $region16: #{sentence_encoder_forward.1} parent=1 // pred_region
      %s131 = ssub.s32 32, 32
      %132 = vsyncadd [#allocation3], %s131
      %s134 = sshll.u32 [#allocation2], 4
      %s135 = int_to_ptr.vmem [resolvable:$true] %s134
      %137 = dma.vmem_to_hbm [thread:$0]  %s135, 32, %s3, [#allocation3]
    $region17: #{sentence_encoder_forward.1} parent=1 // pred_fallthru
      _
    // Predicated region
    $region18: #{sentence_encoder_forward.1} parent=1 // pred_check
      _
    $region19: #{sentence_encoder_forward.1} parent=1 // pred_check_branch
      %139 = sbr.rel (0) target = $region21
    $region20: #{sentence_encoder_forward.1} parent=1 // pred_region
      %140 = dma.done [#allocation3], 32
    $region21: #{sentence_encoder_forward.1} parent=1 // pred_fallthru
      _
    %141 = vsyncpa [#allocation3], 1

</llo_original>
